<compile_context>
chip_gen: v7x
topology: tpu7x:2x2x1
jax: 0.10.0
libtpu: 0.0.40
codegen_flags: <defaults>
</compile_context>

<pallas_src>
import jax
import jax.numpy as jnp
from jax.experimental import pallas as pl
from jax.experimental.pallas import tpu as pltpu


def _affine_kernel(w_ref, b_ref, x_ref, o_ref):
    # w_ref, b_ref: SMEM f32 scalars (shape (1,)); x_ref/o_ref: [BR, C] VMEM
    # tiles, fully sublane+lane dense.  One VPU FMA per vreg, f32 accumulate.
    w = w_ref[0]
    b = b_ref[0]
    y = x_ref[...].astype(jnp.float32) * w + b
    o_ref[...] = y.astype(o_ref.dtype)


def _pallas_affine_2d(x2d, w_s, b_s, *, block_rows=512):
    """x2d: [R, C] slab (C multiple of 128).  Returns w*x2d + b, same shape."""
    R, C = x2d.shape
    # Block rows: either the full row extent (allowed regardless of
    # divisibility) or a multiple of 8 (block_rows default is).
    br = min(block_rows, R)
    grid = (pl.cdiv(R, br),)
    return pl.pallas_call(
        _affine_kernel,
        out_shape=jax.ShapeDtypeStruct((R, C), x2d.dtype),
        grid=grid,
        in_specs=[
            pl.BlockSpec(memory_space=pltpu.MemorySpace.SMEM),   # weight scalar
            pl.BlockSpec(memory_space=pltpu.MemorySpace.SMEM),   # bias scalar
            pl.BlockSpec((br, C), lambda i: (i, 0)),             # x tile [br, C]
        ],
        out_specs=pl.BlockSpec((br, C), lambda i: (i, 0)),       # y tile [br, C]
        compiler_params=pltpu.CompilerParams(
            # Shard the batch stream across v7x's two TensorCores; no-op on
            # single-TC v5e/v6e.
            dimension_semantics=("parallel",),
        ),
    )(w_s, b_s, x2d)


def simple_one(x, weight, bias, *, cols=1024, block_rows=512,
               min_pallas_elems=1 << 15):
    """x: [B, 1], weight: [1, 1], bias: [1] -> [B, 1]  (y = x @ W^T + b)."""
    B, F = x.shape
    assert F == 1 and weight.shape == (1, 1) and bias.shape == (1,)

    # Keep the affine transform in f32 (parity with an f32-parameter Linear).
    w_s = weight.reshape(1).astype(jnp.float32)
    b_s = bias.reshape(1).astype(jnp.float32)
    w = w_s[0]
    b = b_s[0]

    # Small-B fast path: a single fused XLA elementwise op beats any
    # pallas_call dispatch at these sizes.
    if B < max(min_pallas_elems, cols):
        return (x.astype(jnp.float32) * w + b).astype(x.dtype)

    # Bulk: view the batch as a sublane+lane dense [R, cols] slab (row-major
    # reshape, no data movement) and stream it through the Pallas kernel with
    # MB-scale blocks.  The sub-`cols` tail (if any) is handled by one tiny
    # fused XLA op instead of padding + slicing the whole array in HBM.
    b_main = (B // cols) * cols
    x_main = x[:b_main].reshape(b_main // cols, cols)
    y_main = _pallas_affine_2d(x_main, w_s, b_s,
                               block_rows=block_rows).reshape(b_main, 1)
    if b_main == B:
        return y_main
    y_tail = (x[b_main:].astype(jnp.float32) * w + b).astype(x.dtype)
    return jnp.concatenate([y_main, y_tail], axis=0)


if __name__ == "__main__":
    key = jax.random.PRNGKey(0)
    kx, kw, kb, kx2, kx3 = jax.random.split(key, 5)

    F_IN, F_OUT = 1, 1   # SimpleOne: Linear(1, 1)

    # Deterministic parameter init (mimics torch Linear's U(-1/sqrt(fan_in), +)).
    bound = 1.0 / (F_IN ** 0.5)
    weight = jax.random.uniform(kw, (F_OUT, F_IN), jnp.float32, -bound, bound)
    bias = jax.random.uniform(kb, (F_OUT,), jnp.float32, -bound, bound)

    # 1) Small toy batch: exercises the plain-XLA fast path.
    B = 8
    x = jax.random.normal(kx, (B, F_IN), jnp.float32)
    y = jax.block_until_ready(simple_one(x, weight, bias))
    y_ref = x @ weight.T + bias
    assert y.shape == (B, F_OUT)
    assert jnp.allclose(y, y_ref, atol=1e-5, rtol=1e-5)

    # 2) Batch divisible by 1024: pure Pallas dense-slab path (kernel runs).
    B2 = 4096
    x2 = jax.random.normal(kx2, (B2, F_IN), jnp.float32)
    y2 = jax.block_until_ready(simple_one(x2, weight, bias, min_pallas_elems=0))
    y2_ref = x2 @ weight.T + bias
    assert y2.shape == (B2, F_OUT)
    assert jnp.allclose(y2, y2_ref, atol=1e-5, rtol=1e-5)

    # 3) Ragged batch: Pallas bulk (full-extent row block) + XLA tail + concat.
    B3 = 5200
    x3 = jax.random.normal(kx3, (B3, F_IN), jnp.float32)
    y3 = jax.block_until_ready(simple_one(x3, weight, bias, min_pallas_elems=0))
    y3_ref = x3 @ weight.T + bias
    assert y3.shape == (B3, F_OUT)
    assert jnp.allclose(y3, y3_ref, atol=1e-5, rtol=1e-5)

    print("KERNEL_OK")
</pallas_src>

<mosaic_0001>
module attributes {stable_mosaic.version = 11 : i64} {
  func.func @_affine_kernel(%arg0: i32, %arg1: memref<1xf32, #tpu.memory_space<smem>>, %arg2: memref<1xf32, #tpu.memory_space<smem>>, %arg3: memref<4x1024xf32, #tpu.memory_space<vmem>>, %arg4: memref<4x1024xf32, #tpu.memory_space<vmem>>) attributes {dimension_semantics = [#tpu.dimension_semantics<parallel>], iteration_bounds = array<i64: 1>, scalar_prefetch = 0 : i64, scratch_operands = 0 : i64, tpu.core_type = #tpu.core_type<tc>, window_params = [{transform_indices = @transform_0, window_bounds = array<i64: 1>}, {transform_indices = @transform_1, window_bounds = array<i64: 1>}, {transform_indices = @transform_2, window_bounds = array<i64: 4, 1024>}, {transform_indices = @transform_3, window_bounds = array<i64: 4, 1024>}]} {
    %c0 = arith.constant 0 : index
    %0 = memref.load %arg1[%c0] : memref<1xf32, #tpu.memory_space<smem>>
    %c0_0 = arith.constant 0 : index
    %1 = memref.load %arg2[%c0_0] : memref<1xf32, #tpu.memory_space<smem>>
    %c0_1 = arith.constant 0 : index
    %c0_2 = arith.constant 0 : index
    %2 = vector.load %arg3[%c0_1, %c0_2] : memref<4x1024xf32, #tpu.memory_space<vmem>>, vector<4x1024xf32>
    %3 = vector.broadcast %0 : f32 to vector<4x1024xf32>
    %4 = arith.mulf %2, %3 : vector<4x1024xf32>
    %5 = vector.broadcast %1 : f32 to vector<4x1024xf32>
    %6 = arith.addf %4, %5 : vector<4x1024xf32>
    %c0_3 = arith.constant 0 : index
    %c0_4 = arith.constant 0 : index
    %7 = vector.load %arg4[%c0_3, %c0_4] : memref<4x1024xf32, #tpu.memory_space<vmem>>, vector<4x1024xf32>
    tpu.vector_store %arg4[%c0_3, %c0_4], %6 {strides = array<i32>} : memref<4x1024xf32, #tpu.memory_space<vmem>>, vector<4x1024xf32>,
    return
  }
  func.func @transform_0(%arg0: i32) -> i32 {
    %c0_i32 = arith.constant 0 : i32
    %c0_i32_0 = arith.constant 0 : i32
    return %c0_i32 : i32
  }
  func.func @transform_1(%arg0: i32) -> i32 {
    %c0_i32 = arith.constant 0 : i32
    %c0_i32_0 = arith.constant 0 : i32
    return %c0_i32 : i32
  }
  func.func @transform_2(%arg0: i32) -> (i32, i32) {
    %c0_i32 = arith.constant 0 : i32
    %c0_i32_0 = arith.constant 0 : i32
    return %arg0, %c0_i32 : i32, i32
  }
  func.func @transform_3(%arg0: i32) -> (i32, i32) {
    %c0_i32 = arith.constant 0 : i32
    %c0_i32_0 = arith.constant 0 : i32
    return %arg0, %c0_i32 : i32, i32
  }
}

</mosaic_0001>

<llo_original>
// kernel: tpu_custom_call.1
$region0: #{tpu_custom_call.1}
  #allocation0 [shape = 'u32[]', space=smem, size = 0x4, offset = 0x4, fixed_abs, tag = 'smem constant byte address 0x4 - core index']
  #allocation1 [shape = 'u32[144,128]{1,0:T(1,128)}', space=vmem, size = 0x12000, scoped, tag = 'internal scratch']
  #allocation2 [shape = 'f32[1]{0:T(128)S(6)}', space=smem, size = 0x200, scoped, tag = 'scoped memory for tpu_custom_call.1']
  #allocation3 [shape = 'f32[1]{0:T(128)S(6)}', space=smem, size = 0x200, scoped, tag = 'scoped memory for tpu_custom_call.1']
  %s0 = inlined_call_operand.<no memory space> [shape: f32[1], index: 0, kind: input, shape index: {}]
  %s1 = inlined_call_operand.<no memory space> [shape: f32[1], index: 1, kind: input, shape index: {}]
  %s2 = inlined_call_operand.hbm [shape: f32[4,1024], index: 2, kind: input, shape index: {}]
  %s3 = inlined_call_operand.hbm [shape: f32[4,1024], index: 3, kind: output, shape index: {}]
  %s4 = sld [smem:[#allocation0]]
  $region26: #{tpu_custom_call.1} parent=0
    _
  %s6 = ssub.s32 1, %s4
  %s7 = scalar_select 0, %s6, %s4
  %8 = sst [smem:[#allocation2]] %s0
  %9 = sst [smem:[#allocation3]] %s1
  $region1: #{tpu_custom_call.1} parent=0
    #allocation4 [shape = 'u8[16384]{0}', space=vmem, size = 0x4000, scoped, tag = 'input window, operand 2, single buffered']
    #allocation5 [shape = 's32[1]{0}', space=sflag, size = 0x4, scoped, tag = 'scoped memory for tpu_custom_call.1']
    #allocation6 [shape = 's32[1]{0}', space=sflag, size = 0x4, scoped, tag = 'scoped memory for tpu_custom_call.1']
    #allocation7 [shape = 'u8[16384]{0}', space=vmem, size = 0x4000, scoped, tag = 'output window, operand 0, single buffered']
    %10 = vsyncpa [#allocation5], 0
    %11 = vsyncpa [#allocation6], 0
    // Predicated region
    $region2: #{tpu_custom_call.1} parent=1 // pred_check
      _
    $region3: #{tpu_custom_call.1} parent=1 // pred_check_branch
      %13 = sbr.rel (0) target = $region5
    $region4: #{tpu_custom_call.1} parent=1 // pred_region
      _
    $region5: #{tpu_custom_call.1} parent=1 // pred_fallthru
      _
    // Predicated region
    $region6: #{tpu_custom_call.1} parent=1 // pred_check
      _
    $region7: #{tpu_custom_call.1} parent=1 // pred_check_branch
      %15 = sbr.rel (0) target = $region9
    $region8: #{tpu_custom_call.1} parent=1 // pred_region
      _
    $region9: #{tpu_custom_call.1} parent=1 // pred_fallthru
      _
    // Predicated region
    $region10: #{tpu_custom_call.1} parent=1 // pred_check
      _
    $region11: #{tpu_custom_call.1} parent=1 // pred_check_branch
      %17 = sbr.rel (0) target = $region13
    $region12: #{tpu_custom_call.1} parent=1 // pred_region
      %s19 = ssub.s32 512, 512
      %20 = vsyncadd [#allocation5], %s19
      %s22 = sshll.u32 [#allocation4], 4
      %s23 = int_to_ptr.vmem [resolvable:$true] %s22
      %25 = dma.hbm_to_vmem [thread:$0]  %s2, 512, %s23, [#allocation5]
    $region13: #{tpu_custom_call.1} parent=1 // pred_fallthru
      _
    // Predicated region
    $region14: #{tpu_custom_call.1} parent=1 // pred_check
      _
    $region15: #{tpu_custom_call.1} parent=1 // pred_check_branch
      %27 = sbr.rel (0) target = $region17
    $region16: #{tpu_custom_call.1} parent=1 // pred_region
      %28 = dma.done [#allocation5], 512
    $region17: #{tpu_custom_call.1} parent=1 // pred_fallthru
      _
    %s29 = sld [smem:[#allocation2]]
    %s30 = sld [smem:[#allocation3]]
    %v31 = vld [vmem:[#allocation4] sm:$0xff]
    %v32 = vld [vmem:[#allocation4 + $0x8] sm:$0xff]
    %v33 = vld [vmem:[#allocation4 + $0x10] sm:$0xff]
    %v34 = vld [vmem:[#allocation4 + $0x18] sm:$0xff]
    %v35 = vstv %s29
    %v36 = vmul.f32 %v31, %v35
    %v37 = vmul.f32 %v32, %v35
    %v38 = vmul.f32 %v33, %v35
    %v39 = vmul.f32 %v34, %v35
    %v40 = vstv %s30
    %v41 = vadd.f32 %v36, %v40
    %v42 = vadd.f32 %v37, %v40
    %v43 = vadd.f32 %v38, %v40
    %v44 = vadd.f32 %v39, %v40
    %45 = vst [vmem:[#allocation7] sm:$0xff] %v41
    %46 = vst [vmem:[#allocation7 + $0x8] sm:$0xff] %v42
    %47 = vst [vmem:[#allocation7 + $0x10] sm:$0xff] %v43
    %48 = vst [vmem:[#allocation7 + $0x18] sm:$0xff] %v44
    // Predicated region
    $region18: #{tpu_custom_call.1} parent=1 // pred_check
      _
    $region19: #{tpu_custom_call.1} parent=1 // pred_check_branch
      %50 = sbr.rel (0) target = $region21
    $region20: #{tpu_custom_call.1} parent=1 // pred_region
      %s52 = ssub.s32 512, 512
      %53 = vsyncadd [#allocation6], %s52
      %s55 = sshll.u32 [#allocation7], 4
      %s56 = int_to_ptr.vmem [resolvable:$true] %s55
      %58 = dma.vmem_to_hbm [thread:$0]  %s56, 512, %s3, [#allocation6]
    $region21: #{tpu_custom_call.1} parent=1 // pred_fallthru
      _
    // Predicated region
    $region22: #{tpu_custom_call.1} parent=1 // pred_check
      _
    $region23: #{tpu_custom_call.1} parent=1 // pred_check_branch
      %60 = sbr.rel (0) target = $region25
    $region24: #{tpu_custom_call.1} parent=1 // pred_region
      %61 = dma.done [#allocation6], 512
    $region25: #{tpu_custom_call.1} parent=1 // pred_fallthru
      _
    %62 = vsyncpa [#allocation5], 1
    %63 = vsyncpa [#allocation6], 1

</llo_original>
